<compile_context>
chip_gen: v7x
topology: tpu7x:2x2x1
jax: 0.10.0
libtpu: 0.0.40
codegen_flags: <defaults>
</compile_context>

<pallas_src>
import numpy as np
import jax
import jax.numpy as jnp
from jax.experimental import pallas as pl
from jax.experimental.pallas import tpu as pltpu


def custom_cnn_kernel(x_ref, a_ref, cb_ref, w1_ref, b1_ref, w2_ref, b2_ref, o_ref):
    # x_ref : (W, TB)   bf16      a_ref : (C*Lc, W)  bf16     cb_ref: (C*Lc, 1) f32
    # w1_ref: (10, C*Lc) bf16     b1_ref: (10, 1) f32
    # w2_ref: (10, 1) f32         b2_ref: (1, 1) f32          o_ref : (1, TB) f32
    x = x_ref[...]

    # conv1d(in=1,out=14,k=3) + bias + ReLU == one MXU matmul (im2col weights),
    # batch on lanes; bias/ReLU on the f32 accumulator.
    z = jnp.dot(a_ref[...], x, preferred_element_type=jnp.float32) + cb_ref[...]
    z = jnp.maximum(z, 0.0)                                    # (C*Lc, TB) f32

    # AvgPool1d(2,1) + flatten + fc1 folded into one MXU matmul, then ReLU.
    h = jnp.dot(w1_ref[...], z.astype(w1_ref.dtype),
                preferred_element_type=jnp.float32) + b1_ref[...]
    h = jnp.maximum(h, 0.0)                                    # (10, TB) f32

    # fc2: 10-row sublane reduction (VPU/XLU) instead of a 1-wide MXU dot.
    out = jnp.sum(h * w2_ref[...], axis=0, keepdims=True) + b2_ref[...]
    o_ref[...] = out.astype(o_ref.dtype)                       # (1, TB)


def _round_up(n, m):
    return ((n + m - 1) // m) * m


def prepare_params(raw_params, window_size):
    """Build kernel-ready (transposed, bf16 where MXU-bound) matrices."""
    cw, cb, w1, b1, w2, b2 = raw_params
    cw = np.asarray(cw, np.float32)               # (14, 3)      conv1d.weight (in-ch squeezed)
    cb = np.asarray(cb, np.float32)               # (14,)        conv1d.bias
    w1 = np.asarray(w1, np.float32)               # (10, 14*Lp)  fc1.weight
    b1 = np.asarray(b1, np.float32)               # (10,)        fc1.bias
    w2 = np.asarray(w2, np.float32)               # (1, 10)      fc2.weight
    b2 = np.asarray(b2, np.float32)               # (1,)         fc2.bias

    C, K = cw.shape
    W = window_size
    Lc = W - (K - 1)                              # conv output length
    Lp = Lc - 1                                   # pool output length

    # Transposed im2col matrix: z_T[c*Lc+l, b] = sum_k A_T[c*Lc+l, l+k] * x_T[l+k, b]
    A_T = np.zeros((C * Lc, W), np.float32)
    for k in range(K):
        for l in range(Lc):
            A_T[np.arange(C) * Lc + l, l + k] = cw[:, k]

    cb_col = np.repeat(cb, Lc)[:, None]           # (C*Lc, 1) conv bias per output row

    # Pooling matrix (linear, applied AFTER ReLU), folded into fc1:
    # pooled[c*Lp+p] = 0.5*(z[c*Lc+p] + z[c*Lc+p+1]);   W1p_T = w1 @ P.T  -> (10, C*Lc)
    P = np.zeros((C * Lc, C * Lp), np.float32)
    for c in range(C):
        for p in range(Lp):
            P[c * Lc + p, c * Lp + p] = 0.5
            P[c * Lc + p + 1, c * Lp + p] = 0.5
    W1p_T = w1 @ P.T                              # (10, C*Lc)

    return (jnp.asarray(A_T, jnp.bfloat16),
            jnp.asarray(cb_col, jnp.float32),
            jnp.asarray(W1p_T, jnp.bfloat16),
            jnp.asarray(b1[:, None], jnp.float32),
            jnp.asarray(w2.reshape(-1, 1), jnp.float32),   # (10, 1)
            jnp.asarray(b2.reshape(1, 1), jnp.float32))


def custom_cnn_forward(x, kparams, tb_max=2048):
    """x: (B, 1, W) float32; kparams from prepare_params. Returns (B, 1) f32."""
    A_T, cb_col, W1p_T, b1_col, w2_col, b2 = kparams
    B = x.shape[0]
    W = x.shape[-1]

    # Pick the tile COUNT first (>=2 so both v7x TensorCores get work), then
    # derive the lane tile tb (multiple of 128). Worst-case padding < one tile.
    ntiles = max(2, pl.cdiv(B, tb_max))
    tb = _round_up(pl.cdiv(B, ntiles), 128)
    Bp = ntiles * tb

    # Batch on lanes: (W, Bp) bf16 -> lane-dense, half-width input reads.
    x_t = x.reshape(B, W).T.astype(jnp.bfloat16)
    if Bp != B:
        x_t = jnp.pad(x_t, ((0, 0), (0, Bp - B)))

    out = pl.pallas_call(
        custom_cnn_kernel,
        out_shape=jax.ShapeDtypeStruct((1, Bp), jnp.float32),
        grid=(ntiles,),
        in_specs=[
            pl.BlockSpec((W, tb), lambda i: (0, i)),           # streamed per tile
            pl.BlockSpec(A_T.shape, lambda i: (0, 0)),         # weights: VMEM-resident
            pl.BlockSpec(cb_col.shape, lambda i: (0, 0)),
            pl.BlockSpec(W1p_T.shape, lambda i: (0, 0)),
            pl.BlockSpec(b1_col.shape, lambda i: (0, 0)),
            pl.BlockSpec(w2_col.shape, lambda i: (0, 0)),
            pl.BlockSpec(b2.shape, lambda i: (0, 0)),
        ],
        out_specs=pl.BlockSpec((1, tb), lambda i: (0, i)),     # lane-dense output row
        compiler_params=pltpu.CompilerParams(
            dimension_semantics=("parallel",)),
    )(x_t, A_T, cb_col, W1p_T, b1_col, w2_col, b2)

    return out[0, :B].reshape(B, 1)


def init_params(key, window_size):
    """Deterministic synthetic parameters with PyTorch-implied shapes."""
    conv_out = window_size - 2
    pool_out = conv_out - 1
    fc1_in = 14 * pool_out

    ks = jax.random.split(key, 6)
    cw = 0.1 * jax.random.normal(ks[0], (14, 3), jnp.float32)       # conv weight (in-ch squeezed)
    cb = 0.1 * jax.random.normal(ks[1], (14,), jnp.float32)         # conv bias
    w1 = 0.1 * jax.random.normal(ks[2], (10, fc1_in), jnp.float32)  # fc1.weight
    b1 = 0.1 * jax.random.normal(ks[3], (10,), jnp.float32)         # fc1.bias
    w2 = 0.1 * jax.random.normal(ks[4], (1, 10), jnp.float32)       # fc2.weight
    b2 = 0.1 * jax.random.normal(ks[5], (1,), jnp.float32)          # fc2.bias
    return (cw, cb, w1, b1, w2, b2)


def reference_forward(x, raw_params):
    """Pure-JAX (f32) mirror of the PyTorch forward, for validation."""
    cw, cb, w1, b1, w2, b2 = raw_params
    B, _, W = x.shape
    xs = x[:, 0, :]
    C, K = cw.shape
    Lc, Lp = W - K + 1, W - K
    conv = jnp.zeros((B, C, Lc), jnp.float32)
    for k in range(K):
        conv = conv + xs[:, None, k:k + Lc] * cw[None, :, k][:, :, None]
    conv = jnp.maximum(conv + cb[None, :, None], 0.0)
    pooled = 0.5 * (conv[:, :, :Lp] + conv[:, :, 1:])
    flat = pooled.reshape(B, C * Lp)
    h = jnp.maximum(flat @ w1.T + b1[None, :], 0.0)
    return h @ w2.T + b2[None, :]


if __name__ == "__main__":
    window_size = 16
    batch = 4

    key = jax.random.PRNGKey(0)
    k_x, k_p = jax.random.split(key)
    x = jax.random.normal(k_x, (batch, 1, window_size), jnp.float32)

    raw = init_params(k_p, window_size)
    kparams = prepare_params(raw, window_size)

    out = custom_cnn_forward(x, kparams)
    out = jax.block_until_ready(out)

    ref = reference_forward(x, raw)
    assert out.shape == (batch, 1), out.shape
    # bf16 MXU operands with f32 accumulation -> tolerance loosened vs pure f32.
    assert jnp.allclose(out, ref, atol=3e-2, rtol=3e-2), (out, ref)

    print("KERNEL_OK")
</pallas_src>

<mosaic_0001>
module attributes {stable_mosaic.version = 11 : i64} {
  func.func @custom_cnn_kernel(%arg0: i32, %arg1: memref<16x128xbf16, #tpu.memory_space<vmem>>, %arg2: memref<196x16xbf16, #tpu.memory_space<vmem>>, %arg3: memref<196x1xf32, #tpu.memory_space<vmem>>, %arg4: memref<10x196xbf16, #tpu.memory_space<vmem>>, %arg5: memref<10x1xf32, #tpu.memory_space<vmem>>, %arg6: memref<10x1xf32, #tpu.memory_space<vmem>>, %arg7: memref<1x1xf32, #tpu.memory_space<vmem>>, %arg8: memref<1x128xf32, #tpu.memory_space<vmem>>) attributes {dimension_semantics = [#tpu.dimension_semantics<parallel>], iteration_bounds = array<i64: 2>, scalar_prefetch = 0 : i64, scratch_operands = 0 : i64, tpu.core_type = #tpu.core_type<tc>, window_params = [{transform_indices = @transform_0, window_bounds = array<i64: 16, 128>}, {pipeline_mode = #tpu.pipeline_mode<synchronous>, transform_indices = @transform_1, window_bounds = array<i64: 196, 16>}, {pipeline_mode = #tpu.pipeline_mode<synchronous>, transform_indices = @transform_2, window_bounds = array<i64: 196, 1>}, {pipeline_mode = #tpu.pipeline_mode<synchronous>, transform_indices = @transform_3, window_bounds = array<i64: 10, 196>}, {pipeline_mode = #tpu.pipeline_mode<synchronous>, transform_indices = @transform_4, window_bounds = array<i64: 10, 1>}, {pipeline_mode = #tpu.pipeline_mode<synchronous>, transform_indices = @transform_5, window_bounds = array<i64: 10, 1>}, {pipeline_mode = #tpu.pipeline_mode<synchronous>, transform_indices = @transform_6, window_bounds = array<i64: 1, 1>}, {transform_indices = @transform_7, window_bounds = array<i64: 1, 128>}]} {
    %c0 = arith.constant 0 : index
    %c0_0 = arith.constant 0 : index
    %0 = vector.load %arg1[%c0, %c0_0] : memref<16x128xbf16, #tpu.memory_space<vmem>>, vector<16x128xbf16>
    %c0_1 = arith.constant 0 : index
    %c0_2 = arith.constant 0 : index
    %1 = vector.load %arg2[%c0_1, %c0_2] : memref<196x16xbf16, #tpu.memory_space<vmem>>, vector<196x16xbf16>
    %cst = arith.constant dense<0.000000e+00> : vector<196x128xf32>
    %2 = tpu.matmul %1, %0, %cst {dimension_numbers = #tpu.dot_dimension_numbers<[1], [0], [0], [1], [0, 0, 1, 1], [], []>} : vector<196x16xbf16>, vector<16x128xbf16>, vector<196x128xf32> -> vector<196x128xf32>
    %c0_3 = arith.constant 0 : index
    %c0_4 = arith.constant 0 : index
    %3 = vector.load %arg3[%c0_3, %c0_4] : memref<196x1xf32, #tpu.memory_space<vmem>>, vector<196x1xf32>
    %4 = vector.broadcast %3 : vector<196x1xf32> to vector<196x128xf32>
    %5 = arith.addf %2, %4 : vector<196x128xf32>
    %cst_5 = arith.constant 0.000000e+00 : f32
    %6 = vector.broadcast %cst_5 : f32 to vector<196x128xf32>
    %7 = arith.maximumf %5, %6 : vector<196x128xf32>
    %c0_6 = arith.constant 0 : index
    %c0_7 = arith.constant 0 : index
    %8 = vector.load %arg4[%c0_6, %c0_7] : memref<10x196xbf16, #tpu.memory_space<vmem>>, vector<10x196xbf16>
    %9 = arith.truncf %7 : vector<196x128xf32> to vector<196x128xbf16>
    %cst_8 = arith.constant dense<0.000000e+00> : vector<10x128xf32>
    %10 = tpu.matmul %8, %9, %cst_8 {dimension_numbers = #tpu.dot_dimension_numbers<[1], [0], [0], [1], [0, 0, 1, 1], [], []>} : vector<10x196xbf16>, vector<196x128xbf16>, vector<10x128xf32> -> vector<10x128xf32>
    %c0_9 = arith.constant 0 : index
    %c0_10 = arith.constant 0 : index
    %11 = vector.load %arg5[%c0_9, %c0_10] : memref<10x1xf32, #tpu.memory_space<vmem>>, vector<10x1xf32>
    %12 = vector.broadcast %11 : vector<10x1xf32> to vector<10x128xf32>
    %13 = arith.addf %10, %12 : vector<10x128xf32>
    %cst_11 = arith.constant 0.000000e+00 : f32
    %14 = vector.broadcast %cst_11 : f32 to vector<10x128xf32>
    %15 = arith.maximumf %13, %14 : vector<10x128xf32>
    %c0_12 = arith.constant 0 : index
    %c0_13 = arith.constant 0 : index
    %16 = vector.load %arg6[%c0_12, %c0_13] : memref<10x1xf32, #tpu.memory_space<vmem>>, vector<10x1xf32>
    %17 = vector.broadcast %16 : vector<10x1xf32> to vector<10x128xf32>
    %18 = arith.mulf %15, %17 : vector<10x128xf32>
    %cst_14 = arith.constant dense<0.000000e+00> : vector<128xf32>
    %19 = vector.multi_reduction <add>, %18, %cst_14 [0] : vector<10x128xf32> to vector<128xf32>
    %20 = vector.shape_cast %19 : vector<128xf32> to vector<1x128xf32>
    %c0_15 = arith.constant 0 : index
    %c0_16 = arith.constant 0 : index
    %21 = vector.load %arg7[%c0_15, %c0_16] : memref<1x1xf32, #tpu.memory_space<vmem>>, vector<1x1xf32>
    %22 = vector.broadcast %21 : vector<1x1xf32> to vector<1x128xf32>
    %23 = arith.addf %20, %22 : vector<1x128xf32>
    %c0_17 = arith.constant 0 : index
    %c0_18 = arith.constant 0 : index
    %24 = vector.load %arg8[%c0_17, %c0_18] : memref<1x128xf32, #tpu.memory_space<vmem>>, vector<1x128xf32>
    tpu.vector_store %arg8[%c0_17, %c0_18], %23 {strides = array<i32>} : memref<1x128xf32, #tpu.memory_space<vmem>>, vector<1x128xf32>,
    return
  }
  func.func @transform_0(%arg0: i32) -> (i32, i32) {
    %c0_i32 = arith.constant 0 : i32
    %c0_i32_0 = arith.constant 0 : i32
    return %c0_i32, %arg0 : i32, i32
  }
  func.func @transform_1(%arg0: i32) -> (i32, i32) {
    %c0_i32 = arith.constant 0 : i32
    %c0_i32_0 = arith.constant 0 : i32
    %c0_i32_1 = arith.constant 0 : i32
    return %c0_i32, %c0_i32_0 : i32, i32
  }
  func.func @transform_2(%arg0: i32) -> (i32, i32) {
    %c0_i32 = arith.constant 0 : i32
    %c0_i32_0 = arith.constant 0 : i32
    %c0_i32_1 = arith.constant 0 : i32
    return %c0_i32, %c0_i32_0 : i32, i32
  }
  func.func @transform_3(%arg0: i32) -> (i32, i32) {
    %c0_i32 = arith.constant 0 : i32
    %c0_i32_0 = arith.constant 0 : i32
    %c0_i32_1 = arith.constant 0 : i32
    return %c0_i32, %c0_i32_0 : i32, i32
  }
  func.func @transform_4(%arg0: i32) -> (i32, i32) {
    %c0_i32 = arith.constant 0 : i32
    %c0_i32_0 = arith.constant 0 : i32
    %c0_i32_1 = arith.constant 0 : i32
    return %c0_i32, %c0_i32_0 : i32, i32
  }
  func.func @transform_5(%arg0: i32) -> (i32, i32) {
    %c0_i32 = arith.constant 0 : i32
    %c0_i32_0 = arith.constant 0 : i32
    %c0_i32_1 = arith.constant 0 : i32
    return %c0_i32, %c0_i32_0 : i32, i32
  }
  func.func @transform_6(%arg0: i32) -> (i32, i32) {
    %c0_i32 = arith.constant 0 : i32
    %c0_i32_0 = arith.constant 0 : i32
    %c0_i32_1 = arith.constant 0 : i32
    return %c0_i32, %c0_i32_0 : i32, i32
  }
  func.func @transform_7(%arg0: i32) -> (i32, i32) {
    %c0_i32 = arith.constant 0 : i32
    %c0_i32_0 = arith.constant 0 : i32
    return %c0_i32, %arg0 : i32, i32
  }
}

</mosaic_0001>

<llo_original>
// kernel: tpu_custom_call.1
$region0: #{tpu_custom_call.1}
  #allocation0 [shape = 'u32[]', space=smem, size = 0x4, offset = 0x4, fixed_abs, tag = 'smem constant byte address 0x4 - core index']
  #allocation1 [shape = 'u32[144,128]{1,0:T(1,128)}', space=vmem, size = 0x12000, scoped, tag = 'internal scratch']
  #allocation2 [shape = 'f32[1,1]{1,0:T(1,128)S(1)}', space=vmem, size = 0x200, scoped, tag = 'scoped memory for tpu_custom_call.1']
  %s0 = inlined_call_operand.vmem [shape: bf16[16,256], index: 0, kind: input, shape index: {}]
  %s1 = inlined_call_operand.vmem [shape: bf16[196,16], index: 1, kind: input, shape index: {}]
  %s2 = inlined_call_operand.vmem [shape: f32[196,1], index: 2, kind: input, shape index: {}]
  %s3 = inlined_call_operand.vmem [shape: bf16[10,196], index: 3, kind: input, shape index: {}]
  %s4 = inlined_call_operand.vmem [shape: f32[10,1], index: 4, kind: input, shape index: {}]
  %s5 = inlined_call_operand.vmem [shape: f32[10,1], index: 5, kind: input, shape index: {}]
  %s6 = inlined_call_operand.<no memory space> [shape: f32[1,1], index: 6, kind: input, shape index: {}]
  %s7 = inlined_call_operand.hbm [shape: f32[1,256], index: 7, kind: output, shape index: {}]
  %s8 = sld [smem:[#allocation0]]
  $region102: #{tpu_custom_call.1} parent=0
    _
  %s10 = ssub.s32 1, %s8
  %s11 = scalar_select 0, %s10, %s8
  %v12 = vstv %s6
  %13 = vst [vmem:[#allocation2] sm:$0x1] %v12
  $region1: #{tpu_custom_call.1} parent=0
    #allocation3 [shape = 'u8[8192]{0}', space=vmem, size = 0x2000, scoped, tag = 'input window, operand 0']
    #allocation4 [shape = 'u8[1024]{0}', space=vmem, size = 0x400, scoped, tag = 'output window, operand 0']
    #allocation5 [shape = 's32[2]{0}', space=sflag, size = 0x8, scoped, tag = 'scoped memory for tpu_custom_call.1']
    %14 = vsyncpa [#allocation5], 0
    %s15 = scalar_lea.sflag [#allocation5], 1
    %16 = vsyncpa %s15, 0
    loop: start=0, step=1, limit=4
    $region2: #{tpu_custom_call.1} parent=1 // loop_pre_header
      _
    $region3: #{tpu_custom_call.1} parent=1 // loop_header
      %s18 = sphi 0, %s22
      %p19 = scmp.ge.s32.totalorder %s18, 4
      %s28 = sphi 0, %s30
      %s31 = sphi 0, %s28
      %s32 = sphi 0, %s31
      %s48 = sphi 0, %s32
      %s52 = sphi 0, %s52
      %s54 = sphi 0, %s52
      %s55 = sphi 0, %s54
      %s69 = sphi 0, %s55
      %s73 = sphi 0, %s73
      %s75 = sphi 0, %s73
      %s76 = sphi 0, %s75
      %s90 = sphi 0, %s76
      %s94 = sphi 0, %s94
      %s96 = sphi 0, %s94
      %s97 = sphi 0, %s96
      %s111 = sphi 0, %s97
      %s115 = sphi 0, %s115
      %s117 = sphi 0, %s115
      %s118 = sphi 0, %s117
      %s132 = sphi 0, %s118
      %s136 = sphi 0, %s136
      %s138 = sphi 0, %s136
      %s139 = sphi 0, %s138
      %s153 = sphi 0, %s139
      %s157 = sphi 0, %s157
      %s159 = sphi 0, %s157
      %s160 = sphi 0, %s159
      %s174 = sphi 0, %s160
      %s180 = sphi 0, %s182
      %s183 = sphi 0, %s180
      %s184 = sphi 0, %s183
      %s200 = sphi 0, %s184
    $region4: #{tpu_custom_call.1} parent=1 // loop_header_branch
      %21 = sbr.rel (%p19) target = $region8
    $region5: #{tpu_custom_call.1} parent=1 // loop_body
      %s23 = ssub.s32 %s18, 1
      %s24 = ssub.s32 %s18, 2
      %s25 = sadd.s32 %s18, 1
      %s26 = ssub.s32 %s18, %s25
      %p27 = scmp.eq.s32.totalorder %s26, 0
      %s29 = sadd.s32 %s28, 1
      %s30 = scalar_select %p27, %s28, %s29
      %p33 = pneg %p27
      %p34 = scmp.eq.s32.totalorder %s18, 1
      %p35 = por %p33, %p34
      %p36 = scmp.ne.s32.totalorder %s28, %s31
      %p37 = scmp.eq.s32.totalorder %s18, 0
      %p38 = por %p36, %p37
      %p39 = scmp.ne.s32.totalorder %s28, %s31
      %p40 = scmp.eq.s32.totalorder %s23, 1
      %p41 = por %p39, %p40
      %p42 = scmp.ne.s32.totalorder %s31, %s32
      %p43 = scmp.eq.s32.totalorder %s23, 0
      %p44 = por %p42, %p43
      %p45 = scmp.ne.s32.totalorder %s31, %s32
      %p46 = scmp.eq.s32.totalorder %s24, 1
      %p47 = por %p45, %p46
      %p49 = scmp.ne.s32.totalorder %s32, %s48
      %p50 = scmp.eq.s32.totalorder %s24, 0
      %p51 = por %p49, %p50
      %s53 = sadd.s32 %s52, 1
      %p56 = scmp.eq.s32.totalorder %s18, 1
      %p57 = scmp.ne.s32.totalorder %s52, %s54
      %p58 = scmp.eq.s32.totalorder %s18, 0
      %p59 = por %p57, %p58
      %p60 = scmp.ne.s32.totalorder %s52, %s54
      %p61 = scmp.eq.s32.totalorder %s23, 1
      %p62 = por %p60, %p61
      %p63 = scmp.ne.s32.totalorder %s54, %s55
      %p64 = scmp.eq.s32.totalorder %s23, 0
      %p65 = por %p63, %p64
      %p66 = scmp.ne.s32.totalorder %s54, %s55
      %p67 = scmp.eq.s32.totalorder %s24, 1
      %p68 = por %p66, %p67
      %p70 = scmp.ne.s32.totalorder %s55, %s69
      %p71 = scmp.eq.s32.totalorder %s24, 0
      %p72 = por %p70, %p71
      %s74 = sadd.s32 %s73, 1
      %p77 = scmp.eq.s32.totalorder %s18, 1
      %p78 = scmp.ne.s32.totalorder %s73, %s75
      %p79 = scmp.eq.s32.totalorder %s18, 0
      %p80 = por %p78, %p79
      %p81 = scmp.ne.s32.totalorder %s73, %s75
      %p82 = scmp.eq.s32.totalorder %s23, 1
      %p83 = por %p81, %p82
      %p84 = scmp.ne.s32.totalorder %s75, %s76
      %p85 = scmp.eq.s32.totalorder %s23, 0
      %p86 = por %p84, %p85
      %p87 = scmp.ne.s32.totalorder %s75, %s76
      %p88 = scmp.eq.s32.totalorder %s24, 1
      %p89 = por %p87, %p88
      %p91 = scmp.ne.s32.totalorder %s76, %s90
      %p92 = scmp.eq.s32.totalorder %s24, 0
      %p93 = por %p91, %p92
      %s95 = sadd.s32 %s94, 1
      %p98 = scmp.eq.s32.totalorder %s18, 1
      %p99 = scmp.ne.s32.totalorder %s94, %s96
      %p100 = scmp.eq.s32.totalorder %s18, 0
      %p101 = por %p99, %p100
      %p102 = scmp.ne.s32.totalorder %s94, %s96
      %p103 = scmp.eq.s32.totalorder %s23, 1
      %p104 = por %p102, %p103
      %p105 = scmp.ne.s32.totalorder %s96, %s97
      %p106 = scmp.eq.s32.totalorder %s23, 0
      %p107 = por %p105, %p106
      %p108 = scmp.ne.s32.totalorder %s96, %s97
      %p109 = scmp.eq.s32.totalorder %s24, 1
      %p110 = por %p108, %p109
      %p112 = scmp.ne.s32.totalorder %s97, %s111
      %p113 = scmp.eq.s32.totalorder %s24, 0
      %p114 = por %p112, %p113
      %s116 = sadd.s32 %s115, 1
      %p119 = scmp.eq.s32.totalorder %s18, 1
      %p120 = scmp.ne.s32.totalorder %s115, %s117
      %p121 = scmp.eq.s32.totalorder %s18, 0
      %p122 = por %p120, %p121
      %p123 = scmp.ne.s32.totalorder %s115, %s117
      %p124 = scmp.eq.s32.totalorder %s23, 1
      %p125 = por %p123, %p124
      %p126 = scmp.ne.s32.totalorder %s117, %s118
      %p127 = scmp.eq.s32.totalorder %s23, 0
      %p128 = por %p126, %p127
      %p129 = scmp.ne.s32.totalorder %s117, %s118
      %p130 = scmp.eq.s32.totalorder %s24, 1
      %p131 = por %p129, %p130
      %p133 = scmp.ne.s32.totalorder %s118, %s132
      %p134 = scmp.eq.s32.totalorder %s24, 0
      %p135 = por %p133, %p134
      %s137 = sadd.s32 %s136, 1
      %p140 = scmp.eq.s32.totalorder %s18, 1
      %p141 = scmp.ne.s32.totalorder %s136, %s138
      %p142 = scmp.eq.s32.totalorder %s18, 0
      %p143 = por %p141, %p142
      %p144 = scmp.ne.s32.totalorder %s136, %s138
      %p145 = scmp.eq.s32.totalorder %s23, 1
      %p146 = por %p144, %p145
      %p147 = scmp.ne.s32.totalorder %s138, %s139
      %p148 = scmp.eq.s32.totalorder %s23, 0
      %p149 = por %p147, %p148
      %p150 = scmp.ne.s32.totalorder %s138, %s139
      %p151 = scmp.eq.s32.totalorder %s24, 1
      %p152 = por %p150, %p151
      %p154 = scmp.ne.s32.totalorder %s139, %s153
      %p155 = scmp.eq.s32.totalorder %s24, 0
      %p156 = por %p154, %p155
      %s158 = sadd.s32 %s157, 1
      %p161 = scmp.eq.s32.totalorder %s18, 1
      %p162 = scmp.ne.s32.totalorder %s157, %s159
      %p163 = scmp.eq.s32.totalorder %s18, 0
      %p164 = por %p162, %p163
      %p165 = scmp.ne.s32.totalorder %s157, %s159
      %p166 = scmp.eq.s32.totalorder %s23, 1
      %p167 = por %p165, %p166
      %p168 = scmp.ne.s32.totalorder %s159, %s160
      %p169 = scmp.eq.s32.totalorder %s23, 0
      %p170 = por %p168, %p169
      %p171 = scmp.ne.s32.totalorder %s159, %s160
      %p172 = scmp.eq.s32.totalorder %s24, 1
      %p173 = por %p171, %p172
      %p175 = scmp.ne.s32.totalorder %s160, %s174
      %p176 = scmp.eq.s32.totalorder %s24, 0
      %p177 = por %p175, %p176
      %s178 = ssub.s32 %s18, %s25
      %p179 = scmp.eq.s32.totalorder %s178, 0
      %s181 = sadd.s32 %s180, 1
      %s182 = scalar_select %p179, %s180, %s181
      %p185 = pneg %p179
      %p186 = scmp.eq.s32.totalorder %s18, 1
      %p187 = por %p185, %p186
      %p188 = scmp.ne.s32.totalorder %s180, %s183
      %p189 = scmp.eq.s32.totalorder %s18, 0
      %p190 = por %p188, %p189
      %p191 = scmp.ne.s32.totalorder %s180, %s183
      %p192 = scmp.eq.s32.totalorder %s23, 1
      %p193 = por %p191, %p192
      %p194 = scmp.ne.s32.totalorder %s183, %s184
      %p195 = scmp.eq.s32.totalorder %s23, 0
      %p196 = por %p194, %p195
      %p197 = scmp.ne.s32.totalorder %s183, %s184
      %p198 = scmp.eq.s32.totalorder %s24, 1
      %p199 = por %p197, %p198
      %p201 = scmp.ne.s32.totalorder %s184, %s200
      %p202 = scmp.eq.s32.totalorder %s24, 0
      %p203 = por %p201, %p202
      %p204 = scmp.le.s32.totalorder 1, %s18
      %p205 = scmp.lt.s32.totalorder %s18, 3
      %p206 = pnand %p204, %p205
      %p207 = pneg %p206
      // Predicated region
      $region9: #{tpu_custom_call.1} parent=5 // pred_check
        _
      $region10: #{tpu_custom_call.1} parent=5 // pred_check_branch
        %209 = sbr.rel (%p206) target = $region12
      $region11: #{tpu_custom_call.1} parent=5 // pred_region
        %s210 = ssub.s32 %s18, 1
        // Predicated region
        $region13: #{tpu_custom_call.1} parent=11 // pred_check
          %p211 = pneg %p65
        $region14: #{tpu_custom_call.1} parent=11 // pred_check_branch
          %213 = sbr.rel (%p211) target = $region16
        $region15: #{tpu_custom_call.1} parent=11 // pred_region
          _
        $region16: #{tpu_custom_call.1} parent=11 // pred_fallthru
          _
        // Predicated region
        $region17: #{tpu_custom_call.1} parent=11 // pred_check
          %p214 = pneg %p86
        $region18: #{tpu_custom_call.1} parent=11 // pred_check_branch
          %216 = sbr.rel (%p214) target = $region20
        $region19: #{tpu_custom_call.1} parent=11 // pred_region
          _
        $region20: #{tpu_custom_call.1} parent=11 // pred_fallthru
          _
        // Predicated region
        $region21: #{tpu_custom_call.1} parent=11 // pred_check
          %p217 = pneg %p107
        $region22: #{tpu_custom_call.1} parent=11 // pred_check_branch
          %219 = sbr.rel (%p217) target = $region24
        $region23: #{tpu_custom_call.1} parent=11 // pred_region
          _
        $region24: #{tpu_custom_call.1} parent=11 // pred_fallthru
          _
        // Predicated region
        $region25: #{tpu_custom_call.1} parent=11 // pred_check
          %p220 = pneg %p128
        $region26: #{tpu_custom_call.1} parent=11 // pred_check_branch
          %222 = sbr.rel (%p220) target = $region28
        $region27: #{tpu_custom_call.1} parent=11 // pred_region
          _
        $region28: #{tpu_custom_call.1} parent=11 // pred_fallthru
          _
        // Predicated region
        $region29: #{tpu_custom_call.1} parent=11 // pred_check
          %p223 = pneg %p149
        $region30: #{tpu_custom_call.1} parent=11 // pred_check_branch
          %225 = sbr.rel (%p223) target = $region32
        $region31: #{tpu_custom_call.1} parent=11 // pred_region
          _
        $region32: #{tpu_custom_call.1} parent=11 // pred_fallthru
          _
        // Predicated region
        $region33: #{tpu_custom_call.1} parent=11 // pred_check
          %p226 = pneg %p170
        $region34: #{tpu_custom_call.1} parent=11 // pred_check_branch
          %228 = sbr.rel (%p226) target = $region36
        $region35: #{tpu_custom_call.1} parent=11 // pred_region
          _
        $region36: #{tpu_custom_call.1} parent=11 // pred_fallthru
          _
      $region12: #{tpu_custom_call.1} parent=5 // pred_fallthru
        _
      %p229 = scmp.lt.s32.totalorder %s18, 2
      // Predicated region
      $region37: #{tpu_custom_call.1} parent=5 // pred_check
        %p230 = pneg %p229
      $region38: #{tpu_custom_call.1} parent=5 // pred_check_branch
        %232 = sbr.rel (%p230) target = $region40
      $region39: #{tpu_custom_call.1} parent=5 // pred_region
        // Predicated region
        $region41: #{tpu_custom_call.1} parent=39 // pred_check
          %p233 = pneg %p38
        $region42: #{tpu_custom_call.1} parent=39 // pred_check_branch
          %235 = sbr.rel (%p233) target = $region44
        $region43: #{tpu_custom_call.1} parent=39 // pred_region
          %s236 = sand.u32 %s28, 1
          %s237 = sand.u32 %s28, 1
          %s238 = smul.addr %s237, 8
          %s239 = scalar_lea.vmem [#allocation3], %s238
          %s240 = smul.addr %s18, 4
          %s241 = scalar_lea.vmem %s0, %s240
          // Predicated region
          $region45: #{tpu_custom_call.1} parent=43 // pred_check
            _
          $region46: #{tpu_custom_call.1} parent=43 // pred_check_branch
            %243 = sbr.rel (0) target = $region48
          $region47: #{tpu_custom_call.1} parent=43 // pred_region
            // Predicated region
            $region49: #{tpu_custom_call.1} parent=47 // pred_check
              _
            $region50: #{tpu_custom_call.1} parent=47 // pred_check_branch
              %245 = sbr.rel target = $region52
            $region51: #{tpu_custom_call.1} parent=47 // pred_region
              // Predicated region
              $region64: #{tpu_custom_call.1} parent=51 // pred_check
                _
              $region65: #{tpu_custom_call.1} parent=51 // pred_check_branch
                %262 = sbr.rel (0) target = $region67
              $region66: #{tpu_custom_call.1} parent=51 // pred_region
                loop: start=0, step=1, limit=1
                $region68: #{tpu_custom_call.1} parent=66 // loop_pre_header
                  _
                $region69: #{tpu_custom_call.1} parent=66 // loop_header
                  %s264 = sphi 0, %s268
                  %p265 = scmp.ge.s32.totalorder %s264, 1
                  %s269 = sphi %s241, %s241
                  %s270 = sphi %s239, %s239
                $region70: #{tpu_custom_call.1} parent=66 // loop_header_branch
                  %267 = sbr.rel (%p265) target = $region74
                $region71: #{tpu_custom_call.1} parent=66 // loop_body
                  _
                $region72: #{tpu_custom_call.1} parent=66 // loop_footer
                  %s268 = sadd.s32 1, %s264
                $region73: #{tpu_custom_call.1} parent=66 // loop_footer_branch
                  %263 = sbr.rel target = $region69
                $region74: #{tpu_custom_call.1} parent=66 // loop_exit
                  _
                loop: start=0, step=1, limit=1
                $region75: #{tpu_custom_call.1} parent=66 // loop_pre_header
                  _
                $region76: #{tpu_custom_call.1} parent=66 // loop_header
                  %s273 = sphi 0, %s277
                  %p274 = scmp.ge.s32.totalorder %s273, 1
                  %s278 = sphi %s241, %s241
                  %s279 = sphi %s239, %s239
                $region77: #{tpu_custom_call.1} parent=66 // loop_header_branch
                  %276 = sbr.rel (%p274) target = $region81
                $region78: #{tpu_custom_call.1} parent=66 // loop_body
                  %v280 = vld [vmem:[%s278] sm:$0xf]
                  %281 = vst [vmem:[%s279] sm:$0xf] %v280
                  %v282 = vld [vmem:[%s278 + $0x8] sm:$0xf]
                  %283 = vst [vmem:[%s279 + $0x4] sm:$0xf] %v282
                $region79: #{tpu_custom_call.1} parent=66 // loop_footer
                  %s277 = sadd.s32 1, %s273
                $region80: #{tpu_custom_call.1} parent=66 // loop_footer_branch
                  %272 = sbr.rel target = $region76
                $region81: #{tpu_custom_call.1} parent=66 // loop_exit
                  _
              $region67: #{tpu_custom_call.1} parent=51 // pred_fallthru
                _
            $region52: #{tpu_custom_call.1} parent=47 // pred_fallthru
              _
            // Predicated region
            $region53: #{tpu_custom_call.1} parent=47 // pred_check
              _
            $region54: #{tpu_custom_call.1} parent=47 // pred_check_branch
              %247 = sbr.rel (0) target = $region56
            $region55: #{tpu_custom_call.1} parent=47 // pred_region
              loop: start=0, step=1, limit=1
              $region57: #{tpu_custom_call.1} parent=55 // loop_pre_header
                _
              $region58: #{tpu_custom_call.1} parent=55 // loop_header
                %s250 = sphi 0, %s254
                %p251 = scmp.ge.s32.totalorder %s250, 1
                %s255 = sphi %s241, %s241
                %s256 = sphi %s239, %s239
              $region59: #{tpu_custom_call.1} parent=55 // loop_header_branch
                %253 = sbr.rel (%p251) target = $region63
              $region60: #{tpu_custom_call.1} parent=55 // loop_body
                %v257 = vld [vmem:[%s255] sm:$0xf]
                %258 = vst [vmem:[%s256] sm:$0xf] %v257
                %v259 = vld [vmem:[%s255 + $0x8] sm:$0xf]
                %260 = vst [vmem:[%s256 + $0x4] sm:$0xf] %v259
              $region61: #{tpu_custom_call.1} parent=55 // loop_footer
                %s254 = sadd.s32 1, %s250
              $region62: #{tpu_custom_call.1} parent=55 // loop_footer_branch
                %249 = sbr.rel target = $region58
              $region63: #{tpu_custom_call.1} parent=55 // loop_exit
                _
            $region56: #{tpu_custom_call.1} parent=47 // pred_fallthru
              _
          $region48: #{tpu_custom_call.1} parent=43 // pred_fallthru
            _
          %284 = vnop
        $region44: #{tpu_custom_call.1} parent=39 // pred_fallthru
          _
      $region40: #{tpu_custom_call.1} parent=5 // pred_fallthru
        _
      %p285 = scmp.le.s32.totalorder 1, %s18
      %p286 = scmp.lt.s32.totalorder %s18, 3
      %p287 = pnand %p285, %p286
      %p288 = pneg %p287
      // Predicated region
      $region82: #{tpu_custom_call.1} parent=5 // pred_check
        _
      $region83: #{tpu_custom_call.1} parent=5 // pred_check_branch
        %290 = sbr.rel (%p287) target = $region85
      $region84: #{tpu_custom_call.1} parent=5 // pred_region
        %s291 = ssub.s32 %s18, 1
        %s292 = sand.u32 %s31, 1
        %s293 = sand.u32 %s31, 1
        %s294 = smul.addr %s293, 8
        %s295 = scalar_lea.vmem [#allocation3], %s294
        // Predicated region
        $region86: #{tpu_custom_call.1} parent=84 // pred_check
          %p296 = pneg %p44
        $region87: #{tpu_custom_call.1} parent=84 // pred_check_branch
          %298 = sbr.rel (%p296) target = $region89
        $region88: #{tpu_custom_call.1} parent=84 // pred_region
          _
        $region89: #{tpu_custom_call.1} parent=84 // pred_fallthru
          _
        %s299 = sand.u32 %s31, 1
        %s300 = sand.u32 %s31, 1
        %s301 = smul.addr %s300, 8
        %s302 = scalar_lea.vmem [#allocation3], %s301
        %p303 = pneg %p44
        %p304 = pneg %p41
        %p305 = pneg %p65
        %p306 = pneg %p62
        %p307 = pneg %p86
        %p308 = pneg %p83
        %p309 = pneg %p107
        %p310 = pneg %p104
        %p311 = pneg %p128
        %p312 = pneg %p125
        %p313 = pneg %p149
        %p314 = pneg %p146
        %p315 = pneg %p170
        %p316 = pneg %p167
        %p317 = pneg %p196
        %p318 = pneg %p193
        %s319 = sand.u32 %s183, 1
        %s320 = scalar_lea.sflag [#allocation5], %s319
        %s321 = sand.u32 %s183, 1
        %s322 = scalar_lea.vmem [#allocation4], %s321
        %v324 = vld [vmem:[%s295] sm:$0xf]
        %v325 = vld [vmem:[%s295 + $0x4] sm:$0xf]
        %v326 = vld [vmem:[%s1] sm:$0xf]
        %v327 = vld [vmem:[%s1 + $0x4] sm:$0xf]
        %v328 = vld [vmem:[%s1 + $0x8] sm:$0xf]
        %v329 = vld [vmem:[%s1 + $0xc] sm:$0xf]
        %v330 = vld [vmem:[%s1 + $0x10] sm:$0xf]
        %v331 = vld [vmem:[%s1 + $0x14] sm:$0xf]
        %v332 = vld [vmem:[%s1 + $0x18] sm:$0xf]
        %v333 = vld [vmem:[%s1 + $0x1c] sm:$0xf]
        %v334 = vld [vmem:[%s1 + $0x20] sm:$0xf]
        %v335 = vld [vmem:[%s1 + $0x24] sm:$0xf]
        %v336 = vld [vmem:[%s1 + $0x28] sm:$0xf]
        %v337 = vld [vmem:[%s1 + $0x2c] sm:$0xf]
        %v338 = vld [vmem:[%s1 + $0x30] sm:$0xf]
        %v339 = vld [vmem:[%s1 + $0x34] sm:$0xf]
        %v340 = vld [vmem:[%s1 + $0x38] sm:$0xf]
        %v341 = vld [vmem:[%s1 + $0x3c] sm:$0xf]
        %v342 = vld [vmem:[%s1 + $0x40] sm:$0xf]
        %v343 = vld [vmem:[%s1 + $0x44] sm:$0xf]
        %v344 = vld [vmem:[%s1 + $0x48] sm:$0xf]
        %v345 = vld [vmem:[%s1 + $0x4c] sm:$0xf]
        %v346 = vld [vmem:[%s1 + $0x50] sm:$0xf]
        %v347 = vld [vmem:[%s1 + $0x54] sm:$0xf]
        %v348 = vld [vmem:[%s1 + $0x58] sm:$0xf]
        %v349 = vld [vmem:[%s1 + $0x5c] sm:$0xf]
        %v350 = vld [vmem:[%s1 + $0x60] sm:$0x3]
        %v351 = vld [vmem:[%s2] sm:$0xff]
        %v352 = vld [vmem:[%s2 + $0x8] sm:$0xff]
        %v353 = vld [vmem:[%s2 + $0x10] sm:$0xff]
        %v354 = vld [vmem:[%s2 + $0x18] sm:$0xff]
        %v355 = vld [vmem:[%s2 + $0x20] sm:$0xff]
        %v356 = vld [vmem:[%s2 + $0x28] sm:$0xff]
        %v357 = vld [vmem:[%s2 + $0x30] sm:$0xff]
        %v358 = vld [vmem:[%s2 + $0x38] sm:$0xff]
        %v359 = vld [vmem:[%s2 + $0x40] sm:$0xff]
        %v360 = vld [vmem:[%s2 + $0x48] sm:$0xff]
        %v361 = vld [vmem:[%s2 + $0x50] sm:$0xff]
        %v362 = vld [vmem:[%s2 + $0x58] sm:$0xff]
        %v363 = vld [vmem:[%s2 + $0x60] sm:$0xff]
        %v364 = vld [vmem:[%s2 + $0x68] sm:$0xff]
        %v365 = vld [vmem:[%s2 + $0x70] sm:$0xff]
        %v366 = vld [vmem:[%s2 + $0x78] sm:$0xff]
        %v367 = vld [vmem:[%s2 + $0x80] sm:$0xff]
        %v368 = vld [vmem:[%s2 + $0x88] sm:$0xff]
        %v369 = vld [vmem:[%s2 + $0x90] sm:$0xff]
        %v370 = vld [vmem:[%s2 + $0x98] sm:$0xff]
        %v371 = vld [vmem:[%s2 + $0xa0] sm:$0xff]
        %v372 = vld [vmem:[%s2 + $0xa8] sm:$0xff]
        %v373 = vld [vmem:[%s2 + $0xb0] sm:$0xff]
        %v374 = vld [vmem:[%s2 + $0xb8] sm:$0xff]
        %v375 = vld [vmem:[%s2 + $0xc0] sm:$0xf]
        %377 = vset.pattern.permute.xlu0 0
        %378 = vperm.xlu0 %377, %v351
        %v379 = vpop.permute.xlu0 %378
        %382 = vset.pattern.permute.xlu0 0
        %383 = vperm.xlu0 %382, %v352
        %v384 = vpop.permute.xlu0 %383
        %387 = vset.pattern.permute.xlu0 0
        %388 = vperm.xlu0 %387, %v353
        %v389 = vpop.permute.xlu0 %388
        %392 = vset.pattern.permute.xlu0 0
        %393 = vperm.xlu0 %392, %v354
        %v394 = vpop.permute.xlu0 %393
        %397 = vset.pattern.permute.xlu0 0
        %398 = vperm.xlu0 %397, %v355
        %v399 = vpop.permute.xlu0 %398
        %402 = vset.pattern.permute.xlu0 0
        %403 = vperm.xlu0 %402, %v356
        %v404 = vpop.permute.xlu0 %403
        %407 = vset.pattern.permute.xlu0 0
        %408 = vperm.xlu0 %407, %v357
        %v409 = vpop.permute.xlu0 %408
        %412 = vset.pattern.permute.xlu0 0
        %413 = vperm.xlu0 %412, %v358
        %v414 = vpop.permute.xlu0 %413
        %417 = vset.pattern.permute.xlu0 0
        %418 = vperm.xlu0 %417, %v359
        %v419 = vpop.permute.xlu0 %418
        %422 = vset.pattern.permute.xlu0 0
        %423 = vperm.xlu0 %422, %v360
        %v424 = vpop.permute.xlu0 %423
        %427 = vset.pattern.permute.xlu0 0
        %428 = vperm.xlu0 %427, %v361
        %v429 = vpop.permute.xlu0 %428
        %432 = vset.pattern.permute.xlu0 0
        %433 = vperm.xlu0 %432, %v362
        %v434 = vpop.permute.xlu0 %433
        %437 = vset.pattern.permute.xlu0 0
        %438 = vperm.xlu0 %437, %v363
        %v439 = vpop.permute.xlu0 %438
        %442 = vset.pattern.permute.xlu0 0
        %443 = vperm.xlu0 %442, %v364
        %v444 = vpop.permute.xlu0 %443
        %447 = vset.pattern.permute.xlu0 0
        %448 = vperm.xlu0 %447, %v365
        %v449 = vpop.permute.xlu0 %448
        %452 = vset.pattern.permute.xlu0 0
        %453 = vperm.xlu0 %452, %v366
        %v454 = vpop.permute.xlu0 %453
        %457 = vset.pattern.permute.xlu0 0
        %458 = vperm.xlu0 %457, %v367
        %v459 = vpop.permute.xlu0 %458
        %462 = vset.pattern.permute.xlu0 0
        %463 = vperm.xlu0 %462, %v368
        %v464 = vpop.permute.xlu0 %463
        %467 = vset.pattern.permute.xlu0 0
        %468 = vperm.xlu0 %467, %v369
        %v469 = vpop.permute.xlu0 %468
        %472 = vset.pattern.permute.xlu0 0
        %473 = vperm.xlu0 %472, %v370
        %v474 = vpop.permute.xlu0 %473
        %477 = vset.pattern.permute.xlu0 0
        %478 = vperm.xlu0 %477, %v371
        %v479 = vpop.permute.xlu0 %478
        %482 = vset.pattern.permute.xlu0 0
        %483 = vperm.xlu0 %482, %v372
        %v484 = vpop.permute.xlu0 %483
        %487 = vset.pattern.permute.xlu0 0
        %488 = vperm.xlu0 %487, %v373
        %v489 = vpop.permute.xlu0 %488
        %492 = vset.pattern.permute.xlu0 0
        %493 = vperm.xlu0 %492, %v374
        %v494 = vpop.permute.xlu0 %493
        %497 = vset.pattern.permute.xlu0 0
        %498 = vperm.xlu0 %497, %v375
        %v499 = vpop.permute.xlu0 %498
        %v526 = vunpack.c.l.b16 %v326
        %v527 = vunpack.c.l.b16 %v327
        %v528 = vunpack.c.l.b16 %v328
        %v529 = vunpack.c.l.b16 %v329
        %v530 = vunpack.c.l.b16 %v330
        %v531 = vunpack.c.l.b16 %v331
        %v532 = vunpack.c.l.b16 %v332
        %v533 = vunpack.c.l.b16 %v333
        %v534 = vunpack.c.l.b16 %v334
        %v535 = vunpack.c.l.b16 %v335
        %v536 = vunpack.c.l.b16 %v336
        %v537 = vunpack.c.l.b16 %v337
        %v538 = vunpack.c.l.b16 %v338
        %v539 = vunpack.c.l.b16 %v339
        %v540 = vunpack.c.l.b16 %v340
        %v541 = vunpack.c.l.b16 %v341
        %v542 = vunpack.c.l.b16 %v342
        %v543 = vunpack.c.l.b16 %v343
        %v544 = vunpack.c.l.b16 %v344
        %v545 = vunpack.c.l.b16 %v345
        %v546 = vunpack.c.l.b16 %v346
        %v547 = vunpack.c.l.b16 %v347
        %v548 = vunpack.c.l.b16 %v348
        %v549 = vunpack.c.l.b16 %v349
        %v550 = vunpack.c.l.b16 %v350
        %v551 = vpack.c.b16 %v527, %v526
        %v552 = vpack.c.b16 %v529, %v528
        %v553 = vpack.c.b16 %v531, %v530
        %v554 = vpack.c.b16 %v533, %v532
        %v555 = vpack.c.b16 %v535, %v534
        %v556 = vpack.c.b16 %v537, %v536
        %v557 = vpack.c.b16 %v539, %v538
        %v558 = vpack.c.b16 %v541, %v540
        %v559 = vpack.c.b16 %v543, %v542
        %v560 = vpack.c.b16 %v545, %v544
        %v561 = vpack.c.b16 %v547, %v546
        %v562 = vpack.c.b16 %v549, %v548
        %v563 = vpack.c.b16 %v550, %v550
        %v566 = vunpack.c.l.b16 %v324
        %v567 = vunpack.c.l.b16 %v325
        %v568 = vpack.c.b16 %v567, %v566
        %vm570 = vcmask 130048
        %v572 = vsel %vm570, %v551, 0
        %v575 = vsel %vm570, %v552, 0
        %v578 = vsel %vm570, %v553, 0
        %v581 = vsel %vm570, %v554, 0
        %v584 = vsel %vm570, %v555, 0
        %v587 = vsel %vm570, %v556, 0
        %v590 = vsel %vm570, %v557, 0
        %v593 = vsel %vm570, %v558, 0
        %v596 = vsel %vm570, %v559, 0
        %v599 = vsel %vm570, %v560, 0
        %v602 = vsel %vm570, %v561, 0
        %v605 = vsel %vm570, %v562, 0
        %v608 = vsel %vm570, %v563, 0
        %610 = vmatprep.subr.bf16.mxu0 0
        %611 = vmatpush1.bf16.msra.mxu0 %v568
        %612 = vmatprep.subr.bf16.mxu0 0
        %613 = vmatpush1.bf16.msra.mxu0 0
        %614 = vmatprep.subr.bf16.mxu0 0
        %615 = vmatpush1.bf16.msra.mxu0 0
        %616 = vmatprep.subr.bf16.mxu0 0
        %617 = vmatpush1.bf16.msra.mxu0 0
        %618 = vmatprep.subr.bf16.mxu0 0
        %619 = vmatpush1.bf16.msra.mxu0 0
        %620 = vmatprep.subr.bf16.mxu0 0
        %621 = vmatpush1.bf16.msra.mxu0 0
        %622 = vmatprep.subr.bf16.mxu0 0
        %623 = vmatpush1.bf16.msra.mxu0 0
        %624 = vmatprep.subr.bf16.mxu0 0
        %625 = vmatpush1.bf16.msra.mxu0 0
        %626 = vmatprep.subr.bf16.mxu0 0
        %627 = vmatpush1.bf16.msra.mxu0 0
        %628 = vmatprep.subr.bf16.mxu0 0
        %629 = vmatpush1.bf16.msra.mxu0 0
        %630 = vmatprep.subr.bf16.mxu0 0
        %631 = vmatpush1.bf16.msra.mxu0 0
        %632 = vmatprep.subr.bf16.mxu0 0
        %633 = vmatpush1.bf16.msra.mxu0 0
        %634 = vmatprep.subr.bf16.mxu0 0
        %635 = vmatpush1.bf16.msra.mxu0 0
        %636 = vmatprep.subr.bf16.mxu0 0
        %637 = vmatpush1.bf16.msra.mxu0 0
        %638 = vmatprep.subr.bf16.mxu0 0
        %639 = vmatpush1.bf16.msra.mxu0 0
        %640 = vmatprep.subr.bf16.mxu0 0
        %641 = vmatpush1.bf16.msra.mxu0 0
        %642 = vmatprep.mubr.bf16.mxu0 0
        %643 = vmatmul.mubr.bf16.gmra.mrb[0].mxu0 %v572
        %v644 = vpop.f32.mrb[0].mxu0
        %v645 = vadd.f32 %v379, %v644
        %v646 = vpop.f32.mrb[0].mxu0
        %v647 = vpop.f32.mrb[0].mxu0
        %v648 = vadd.f32 %v384, %v647
        %v649 = vpop.f32.mrb[0].mxu0
        %650 = vmatprep.mubr.bf16.mxu0 0
        %651 = vmatmul.mubr.bf16.gmra.mrb[0].mxu0 %v575
        %v652 = vpop.f32.mrb[0].mxu0
        %v653 = vadd.f32 %v389, %v652
        %v654 = vpop.f32.mrb[0].mxu0
        %v655 = vpop.f32.mrb[0].mxu0
        %v656 = vadd.f32 %v394, %v655
        %v657 = vpop.f32.mrb[0].mxu0
        %658 = vmatprep.mubr.bf16.mxu0 0
        %659 = vmatmul.mubr.bf16.gmra.mrb[0].mxu0 %v578
        %v660 = vpop.f32.mrb[0].mxu0
        %v661 = vadd.f32 %v399, %v660
        %v662 = vpop.f32.mrb[0].mxu0
        %v663 = vpop.f32.mrb[0].mxu0
        %v664 = vadd.f32 %v404, %v663
        %v665 = vpop.f32.mrb[0].mxu0
        %666 = vmatprep.mubr.bf16.mxu0 0
        %667 = vmatmul.mubr.bf16.gmra.mrb[0].mxu0 %v581
        %v668 = vpop.f32.mrb[0].mxu0
        %v669 = vadd.f32 %v409, %v668
        %v670 = vpop.f32.mrb[0].mxu0
        %v671 = vpop.f32.mrb[0].mxu0
        %v672 = vadd.f32 %v414, %v671
        %v673 = vpop.f32.mrb[0].mxu0
        %674 = vmatprep.mubr.bf16.mxu0 0
        %675 = vmatmul.mubr.bf16.gmra.mrb[0].mxu0 %v584
        %v676 = vpop.f32.mrb[0].mxu0
        %v677 = vadd.f32 %v419, %v676
        %v678 = vpop.f32.mrb[0].mxu0
        %v679 = vpop.f32.mrb[0].mxu0
        %v680 = vadd.f32 %v424, %v679
        %v681 = vpop.f32.mrb[0].mxu0
        %682 = vmatprep.mubr.bf16.mxu0 0
        %683 = vmatmul.mubr.bf16.gmra.mrb[0].mxu0 %v587
        %v684 = vpop.f32.mrb[0].mxu0
        %v685 = vadd.f32 %v429, %v684
        %v686 = vpop.f32.mrb[0].mxu0
        %v687 = vpop.f32.mrb[0].mxu0
        %v688 = vadd.f32 %v434, %v687
        %v689 = vpop.f32.mrb[0].mxu0
        %690 = vmatprep.mubr.bf16.mxu0 0
        %691 = vmatmul.mubr.bf16.gmra.mrb[0].mxu0 %v590
        %v692 = vpop.f32.mrb[0].mxu0
        %v693 = vadd.f32 %v439, %v692
        %v694 = vpop.f32.mrb[0].mxu0
        %v695 = vpop.f32.mrb[0].mxu0
        %v696 = vadd.f32 %v444, %v695
        %v697 = vpop.f32.mrb[0].mxu0
        %698 = vmatprep.mubr.bf16.mxu0 0
        %699 = vmatmul.mubr.bf16.gmra.mrb[0].mxu0 %v593
        %v700 = vpop.f32.mrb[0].mxu0
        %v701 = vadd.f32 %v449, %v700
        %v702 = vpop.f32.mrb[0].mxu0
        %v703 = vpop.f32.mrb[0].mxu0
        %v704 = vadd.f32 %v454, %v703
        %v705 = vpop.f32.mrb[0].mxu0
        %706 = vmatprep.mubr.bf16.mxu0 0
        %707 = vmatmul.mubr.bf16.gmra.mrb[0].mxu0 %v596
        %v708 = vpop.f32.mrb[0].mxu0
        %v709 = vadd.f32 %v459, %v708
        %v710 = vpop.f32.mrb[0].mxu0
        %v711 = vpop.f32.mrb[0].mxu0
        %v712 = vadd.f32 %v464, %v711
        %v713 = vpop.f32.mrb[0].mxu0
        %714 = vmatprep.mubr.bf16.mxu0 0
        %715 = vmatmul.mubr.bf16.gmra.mrb[0].mxu0 %v599
        %v716 = vpop.f32.mrb[0].mxu0
        %v717 = vadd.f32 %v469, %v716
        %v718 = vpop.f32.mrb[0].mxu0
        %v719 = vpop.f32.mrb[0].mxu0
        %v720 = vadd.f32 %v474, %v719
        %v721 = vpop.f32.mrb[0].mxu0
        %722 = vmatprep.mubr.bf16.mxu0 0
        %723 = vmatmul.mubr.bf16.gmra.mrb[0].mxu0 %v602
        %v724 = vpop.f32.mrb[0].mxu0
        %v725 = vadd.f32 %v479, %v724
        %v726 = vpop.f32.mrb[0].mxu0
        %v727 = vpop.f32.mrb[0].mxu0
        %v728 = vadd.f32 %v484, %v727
        %v729 = vpop.f32.mrb[0].mxu0
        %730 = vmatprep.mubr.bf16.mxu0 0
        %731 = vmatmul.mubr.bf16.gmra.mrb[0].mxu0 %v605
        %v732 = vpop.f32.mrb[0].mxu0
        %v733 = vadd.f32 %v489, %v732
        %v734 = vpop.f32.mrb[0].mxu0
        %v735 = vpop.f32.mrb[0].mxu0
        %v736 = vadd.f32 %v494, %v735
        %v737 = vpop.f32.mrb[0].mxu0
        %738 = vmatprep.mubr.bf16.mxu0 0
        %739 = vmatmul.mubr.bf16.gmra.mrb[0].mxu0 %v608
        %v740 = vpop.f32.mrb[0].mxu0
        %v741 = vadd.f32 %v499, %v740
        %v742 = vpop.f32.mrb[0].mxu0
        %v743 = vpop.f32.mrb[0].mxu0
        %v744 = vpop.f32.mrb[0].mxu0
        %745 = vdwg.mxu0
        %v746 = vmax.f32 %v645, 0.0
        %v747 = vmax.f32 %v648, 0.0
        %v748 = vmax.f32 %v653, 0.0
        %v749 = vmax.f32 %v656, 0.0
        %v750 = vmax.f32 %v661, 0.0
        %v751 = vmax.f32 %v664, 0.0
        %v752 = vmax.f32 %v669, 0.0
        %v753 = vmax.f32 %v672, 0.0
        %v754 = vmax.f32 %v677, 0.0
        %v755 = vmax.f32 %v680, 0.0
        %v756 = vmax.f32 %v685, 0.0
        %v757 = vmax.f32 %v688, 0.0
        %v758 = vmax.f32 %v693, 0.0
        %v759 = vmax.f32 %v696, 0.0
        %v760 = vmax.f32 %v701, 0.0
        %v761 = vmax.f32 %v704, 0.0
        %v762 = vmax.f32 %v709, 0.0
        %v763 = vmax.f32 %v712, 0.0
        %v764 = vmax.f32 %v717, 0.0
        %v765 = vmax.f32 %v720, 0.0
        %v766 = vmax.f32 %v725, 0.0
        %v767 = vmax.f32 %v728, 0.0
        %v768 = vmax.f32 %v733, 0.0
        %v769 = vmax.f32 %v736, 0.0
        %v770 = vmax.f32 %v741, 0.0
        %v771 = vld [vmem:[%s3] sm:$0xff]
        %v772 = vld [vmem:[%s3 + $0x8] sm:$0x11]
        %v773 = vpack.c.bf16 %v747, %v746
        %v774 = vpack.c.bf16 %v749, %v748
        %v775 = vpack.c.bf16 %v751, %v750
        %v776 = vpack.c.bf16 %v753, %v752
        %v777 = vpack.c.bf16 %v755, %v754
        %v778 = vpack.c.bf16 %v757, %v756
        %v779 = vpack.c.bf16 %v759, %v758
        %v780 = vpack.c.bf16 %v761, %v760
        %v781 = vpack.c.bf16 %v763, %v762
        %v782 = vpack.c.bf16 %v765, %v764
        %v783 = vpack.c.bf16 %v767, %v766
        %v784 = vpack.c.bf16 %v769, %v768
        %v785 = vpack.c.bf16 %v770, %v770
        %v786 = vld [vmem:[%s4] sm:$0xff]
        %v787 = vld [vmem:[%s4 + $0x8] sm:$0x3]
        %789 = vset.pattern.permute.xlu0 0
        %790 = vperm.xlu0 %789, %v786
        %v791 = vpop.permute.xlu0 %790
        %794 = vset.pattern.permute.xlu0 0
        %795 = vperm.xlu0 %794, %v787
        %v796 = vpop.permute.xlu0 %795
        %v800 = vunpack.c.l.b16 %v771
        %v801 = vunpack.c.h.b16 %v771
        %v802 = vunpack.c.l.b16 %v772
        %v803 = vunpack.c.h.b16 %v772
        %v804 = vpack.c.b16 %v802, %v800
        %v805 = vpack.c.b16 %v803, %v801
        %vm807 = vcmask 556032
        %v809 = vsel %vm807, %v805, 0
        %vm811 = vcmask 1041408
        %v813 = vsel %vm811, %v785, 0
        %815 = vmatprep.subr.bf16.mxu0 0
        %816 = vmatpush1.bf16.msra.mxu0 %v773
        %817 = vmatprep.subr.bf16.mxu0 0
        %818 = vmatpush1.bf16.msra.mxu0 %v774
        %819 = vmatprep.subr.bf16.mxu0 0
        %820 = vmatpush1.bf16.msra.mxu0 %v775
        %821 = vmatprep.subr.bf16.mxu0 0
        %822 = vmatpush1.bf16.msra.mxu0 %v776
        %823 = vmatprep.subr.bf16.mxu0 0
        %824 = vmatpush1.bf16.msra.mxu0 %v777
        %825 = vmatprep.subr.bf16.mxu0 0
        %826 = vmatpush1.bf16.msra.mxu0 %v778
        %827 = vmatprep.subr.bf16.mxu0 0
        %828 = vmatpush1.bf16.msra.mxu0 %v779
        %829 = vmatprep.subr.bf16.mxu0 0
        %830 = vmatpush1.bf16.msra.mxu0 %v780
        %831 = vmatprep.subr.bf16.mxu0 0
        %832 = vmatpush1.bf16.msra.mxu0 %v781
        %833 = vmatprep.subr.bf16.mxu0 0
        %834 = vmatpush1.bf16.msra.mxu0 %v782
        %835 = vmatprep.subr.bf16.mxu0 0
        %836 = vmatpush1.bf16.msra.mxu0 %v783
        %837 = vmatprep.subr.bf16.mxu0 0
        %838 = vmatpush1.bf16.msra.mxu0 %v784
        %839 = vmatprep.subr.bf16.mxu0 0
        %840 = vmatpush1.bf16.msra.mxu0 %v813
        %841 = vmatprep.subr.bf16.mxu0 0
        %842 = vmatpush1.bf16.msra.mxu0 0
        %843 = vmatprep.subr.bf16.mxu0 0
        %844 = vmatpush1.bf16.msra.mxu0 0
        %845 = vmatprep.subr.bf16.mxu0 0
        %846 = vmatpush1.bf16.msra.mxu0 0
        %847 = vmatprep.mubr.bf16.mxu0 %v809
        %848 = vmatmul.mubr.bf16.gmra.mrb[0].mxu0 %v804
        %v849 = vpop.f32.mrb[0].mxu0
        %v850 = vadd.f32 %v791, %v849
        %v851 = vpop.f32.mrb[0].mxu0
        %v852 = vpop.f32.mrb[0].mxu0
        %v853 = vadd.f32 %v796, %v852
        %v854 = vpop.f32.mrb[0].mxu0
        %855 = vdwg.mxu0
        %v856 = vmax.f32 %v850, 0.0
        %v857 = vmax.f32 %v853, 0.0
        %v858 = vld [vmem:[%s5] sm:$0xff]
        %v859 = vld [vmem:[%s5 + $0x8] sm:$0x3]
        %861 = vset.pattern.permute.xlu0 0
        %862 = vperm.xlu0 %861, %v858
        %v863 = vpop.permute.xlu0 %862
        %866 = vset.pattern.permute.xlu0 0
        %867 = vperm.xlu0 %866, %v859
        %v868 = vpop.permute.xlu0 %867
        %v870 = vmul.f32 %v856, %v863
        %v871 = vmul.f32 %v857, %v868
        %v872 = vsel %vm811, %v871, 0.0
        %v873 = vadd.f32 %v870, %v872
        %v874 = vrot.slane %v873, 4
        %v875 = vadd.f32 %v873, %v874
        %v876 = vrot.slane %v875, 2
        %v877 = vadd.f32 %v875, %v876
        %v878 = vrot.slane %v877, 1
        %v879 = vadd.f32 %v877, %v878
        %v880 = vld [vmem:[#allocation2] sm:$0x1]
        %882 = vset.pattern.permute.xlu0 0
        %883 = vperm.xlu0 %882, %v880
        %v884 = vpop.permute.xlu0 %883
        %v886 = vlaneseq
        %v887 = vshrl.u32 %v886, 7
        %v888 = vsub.s32 0, %v887
        %v889 = vrot.slane %v884, %v888
        %v890 = vadd.f32 %v879, %v889
        %891 = vst [vmem:[%s322] sm:$0x1] %v890
        %s892 = sand.u32 %s183, 1
        %s893 = scalar_lea.sflag [#allocation5], %s892
        %s894 = sand.u32 %s183, 1
        %s895 = scalar_lea.vmem [#allocation4], %s894
        // Predicated region
        $region90: #{tpu_custom_call.1} parent=84 // pred_check
          %p896 = pneg %p193
        $region91: #{tpu_custom_call.1} parent=84 // pred_check_branch
          %898 = sbr.rel (%p896) target = $region93
        $region92: #{tpu_custom_call.1} parent=84 // pred_region
          %s900 = ssub.s32 16, 16
          %901 = vsyncadd %s893, %s900
          %s902 = smul.addr %s23, 16
          %s903 = scalar_lea.hbm %s7, %s902
          %s905 = sshll.u32 %s895, 4
          %s906 = int_to_ptr.vmem [resolvable:$true] %s905
          %908 = dma.vmem_to_hbm [thread:$0]  %s906, 16, %s903, %s893
        $region93: #{tpu_custom_call.1} parent=84 // pred_fallthru
          _
      $region85: #{tpu_custom_call.1} parent=5 // pred_fallthru
        _
      %p909 = scmp.le.s32.totalorder 2, %s18
      // Predicated region
      $region94: #{tpu_custom_call.1} parent=5 // pred_check
        %p910 = pneg %p909
      $region95: #{tpu_custom_call.1} parent=5 // pred_check_branch
        %912 = sbr.rel (%p910) target = $region97
      $region96: #{tpu_custom_call.1} parent=5 // pred_region
        %s913 = ssub.s32 %s18, 2
        // Predicated region
        $region98: #{tpu_custom_call.1} parent=96 // pred_check
          %p914 = pneg %p199
        $region99: #{tpu_custom_call.1} parent=96 // pred_check_branch
          %916 = sbr.rel (%p914) target = $region101
        $region100: #{tpu_custom_call.1} parent=96 // pred_region
          %s917 = sand.u32 %s184, 1
          %s918 = scalar_lea.sflag [#allocation5], %s917
          %s919 = sand.u32 %s184, 1
          %s920 = scalar_lea.vmem [#allocation4], %s919
          %921 = dma.done %s918, 16
        $region101: #{tpu_custom_call.1} parent=96 // pred_fallthru
          _
      $region97: #{tpu_custom_call.1} parent=5 // pred_fallthru
        _
    $region6: #{tpu_custom_call.1} parent=1 // loop_footer
      %s22 = sadd.s32 1, %s18
    $region7: #{tpu_custom_call.1} parent=1 // loop_footer_branch
      %17 = sbr.rel target = $region3
    $region8: #{tpu_custom_call.1} parent=1 // loop_exit
      _
    %922 = vsyncpa [#allocation5], 1
    %s923 = scalar_lea.sflag [#allocation5], 1
    %924 = vsyncpa %s923, 1

</llo_original>
